<compile_context>
chip_gen: v7x
topology: tpu7x:2x2x1
jax: 0.10.0
libtpu: 0.0.40
codegen_flags: <defaults>
</compile_context>

<pallas_src>
import jax
import jax.numpy as jnp
from jax import lax
from jax.experimental import pallas as pl
from jax.experimental.pallas import tpu as pltpu

# ---- toy problem sizes (consistent with the module) --------------------------
VOCAB = 64      # vocab_size
EMB   = 32      # embedding_dim
HID   = 32      # hidden_dim (must equal EMB for the PyTorch forward to work)
OUT   = 8       # output_dim
B     = 2       # batch
S     = 8       # sequence length

OUT_PAD = 128   # lane-dense padded output width
TB_MAX  = 256   # cap on documents per grid step


def _pick_tb(batch, tb_max=TB_MAX):
    """Sublane-aligned batch tile.

    Big tiles amortize the ~0.35 us per-grid-step overhead; for batches that
    span more than one minimal tile we aim for >= 2 tiles so the "parallel"
    batch axis can shard across v7x's two TensorCores (no effect on v5e/v6e).
    """
    b8 = ((batch + 7) // 8) * 8
    if b8 <= 8:
        return 8
    half = (batch + 1) // 2
    tb = ((half + 7) // 8) * 8
    return max(8, min(tb, tb_max))


def _doc_classifier_kernel(ids_ref,   # VMEM (TB, S)             int32
                           wf_ref,    # VMEM (V_PAD, OUT_PAD)    f32 (fused, zero-padded)
                           b_ref,     # VMEM (1, OUT_PAD)        f32 (zero-padded cols)
                           out_ref):  # VMEM (TB, OUT_PAD)       f32
    tb, s = ids_ref.shape
    v_pad = wf_ref.shape[0]

    ids = ids_ref[...]                                            # (tb, s) int32

    # One-hot occurrence counts over the (padded) vocab: lane-dense compare
    # over 128 lanes, then a sublane reduce over the sequence axis.
    iota_v = lax.broadcasted_iota(jnp.int32, (tb, s, v_pad), 2)
    one_hot = (iota_v == ids[:, :, None]).astype(jnp.float32)     # (tb, s, v_pad)
    counts = jnp.sum(one_hot, axis=1)                             # (tb, v_pad)

    # Fused mean-pool + output projection: W_fused already contains
    # emb_table @ w_out scaled by 1/S, so one K=128 MXU matmul does it all.
    logits = jnp.dot(counts, wf_ref[...],
                     preferred_element_type=jnp.float32) + b_ref[...]
    out_ref[...] = logits                                         # (tb, OUT_PAD)


def document_classifier_forward(ids, emb_table, w_out, b_out):
    """ids: (B, S) int32; emb_table: (V, E) f32; w_out: (E, O) f32; b_out: (O,) f32."""
    batch, seq = ids.shape
    vocab, emb = emb_table.shape
    out_dim = b_out.shape[0]
    # Mirror the PyTorch module's implicit requirement (self.fc unused => E == H).
    assert w_out.shape == (emb, out_dim), "output weight must be (embedding_dim, output_dim)"
    assert out_dim <= OUT_PAD, f"output_dim {out_dim} exceeds OUT_PAD={OUT_PAD}"

    v_pad = ((vocab + 127) // 128) * 128
    tb = _pick_tb(batch)
    n_tiles = pl.cdiv(batch, tb)
    b_pad = n_tiles * tb

    # Fused weight: embedding -> mean-pool scale -> output projection, done once
    # in the wrapper so the kernel runs a single (TB, V_PAD) @ (V_PAD, OUT_PAD) dot.
    # TODO(synk): for production vocab sizes store W_fused in bf16 and keep it in
    # HBM (memory_space=pl.ANY) with an "arbitrary" vocab K-axis + VMEM f32
    # accumulator; whole-table VMEM is fine at V_PAD=128 (64 KiB), and v7x's
    # 64 MiB VMEM halves the tolerable resident table size vs v5e/v6e.
    w_fused = (emb_table.astype(jnp.float32) @ w_out.astype(jnp.float32)) * jnp.float32(1.0 / seq)
    wf_p = jnp.zeros((v_pad, OUT_PAD), jnp.float32).at[:vocab, :out_dim].set(w_fused)
    b_p = jnp.zeros((1, OUT_PAD), jnp.float32).at[0, :out_dim].set(b_out)

    # Pad batch to a sublane-aligned tile count (pad rows are sliced off below).
    # TODO(synk): ids outside [0, vocab) silently contribute nothing to counts
    # (PyTorch would raise); inputs are assumed valid here.
    ids_p = jnp.zeros((b_pad, seq), jnp.int32).at[:batch].set(ids)

    cost = pl.CostEstimate(
        flops=2 * b_pad * v_pad * OUT_PAD + b_pad * seq * v_pad,
        transcendentals=0,
        bytes_accessed=(ids_p.size * 4 + wf_p.size * 4 + b_p.size * 4
                        + b_pad * OUT_PAD * 4),
    )

    out_padded = pl.pallas_call(
        _doc_classifier_kernel,
        out_shape=jax.ShapeDtypeStruct((b_pad, OUT_PAD), jnp.float32),
        grid_spec=pltpu.PrefetchScalarGridSpec(
            num_scalar_prefetch=0,
            grid=(n_tiles,),
            in_specs=[
                pl.BlockSpec((tb, seq),         lambda i: (i, 0)),
                pl.BlockSpec((v_pad, OUT_PAD),  lambda i: (0, 0)),
                pl.BlockSpec((1, OUT_PAD),      lambda i: (0, 0)),
            ],
            out_specs=pl.BlockSpec((tb, OUT_PAD), lambda i: (i, 0)),
        ),
        compiler_params=pltpu.CompilerParams(
            dimension_semantics=("parallel",)),
        cost_estimate=cost,
    )(ids_p, wf_p, b_p)

    return out_padded[:batch, :out_dim]


if __name__ == "__main__":
    key = jax.random.PRNGKey(0)
    k_ids, k_emb, k_w, k_b = jax.random.split(key, 4)

    # deterministic synthetic parameters (shapes from __init__)
    emb_table = jax.random.normal(k_emb, (VOCAB, EMB), dtype=jnp.float32)
    # nn.Linear(hidden_dim, output_dim): weight (O, H); we pass it transposed (H, O).
    w_out = (jax.random.uniform(k_w, (OUT, HID), dtype=jnp.float32,
                                minval=-1.0, maxval=1.0) / jnp.sqrt(HID)).T
    b_out = jax.random.uniform(k_b, (OUT,), dtype=jnp.float32,
                               minval=-0.1, maxval=0.1)

    ids = jax.random.randint(k_ids, (B, S), 0, VOCAB, dtype=jnp.int32)

    logits = document_classifier_forward(ids, emb_table, w_out, b_out)
    logits = jax.block_until_ready(logits)

    # pure-JAX reference for sanity (unfused order; f32 associativity differs slightly)
    ref = jnp.take(emb_table, ids, axis=0).mean(axis=1) @ w_out + b_out
    assert logits.shape == (B, OUT)
    assert jnp.allclose(logits, ref, atol=1e-5, rtol=1e-5)

    print("KERNEL_OK")
</pallas_src>

<mosaic_0001>
module attributes {stable_mosaic.version = 11 : i64} {
  func.func @_doc_classifier_kernel(%arg0: i32, %arg1: memref<8x8xi32, #tpu.memory_space<vmem>>, %arg2: memref<128x128xf32, #tpu.memory_space<vmem>>, %arg3: memref<1x128xf32, #tpu.memory_space<vmem>>, %arg4: memref<8x128xf32, #tpu.memory_space<vmem>>) attributes {dimension_semantics = [#tpu.dimension_semantics<parallel>], iteration_bounds = array<i64: 1>, scalar_prefetch = 0 : i64, scratch_operands = 0 : i64, tpu.core_type = #tpu.core_type<tc>, window_params = [{transform_indices = @transform_0, window_bounds = array<i64: 8, 8>}, {pipeline_mode = #tpu.pipeline_mode<synchronous>, transform_indices = @transform_1, window_bounds = array<i64: 128, 128>}, {pipeline_mode = #tpu.pipeline_mode<synchronous>, transform_indices = @transform_2, window_bounds = array<i64: 1, 128>}, {transform_indices = @transform_3, window_bounds = array<i64: 8, 128>}]} {
    %c0 = arith.constant 0 : index
    %c0_0 = arith.constant 0 : index
    %0 = vector.load %arg1[%c0, %c0_0] : memref<8x8xi32, #tpu.memory_space<vmem>>, vector<8x8xi32>
    %1 = tpu.iota {dimensions = array<i32: 2>} : vector<8x8x128xi32>
    %2 = vector.shape_cast %0 : vector<8x8xi32> to vector<8x8x1xi32>
    %3 = vector.broadcast %2 : vector<8x8x1xi32> to vector<8x8x128xi32>
    %4 = arith.cmpi eq, %1, %3 : vector<8x8x128xi32>
    %5 = arith.extui %4 : vector<8x8x128xi1> to vector<8x8x128xi32>
    %6 = arith.sitofp %5 : vector<8x8x128xi32> to vector<8x8x128xf32>
    %cst = arith.constant dense<0.000000e+00> : vector<8x128xf32>
    %7 = vector.multi_reduction <add>, %6, %cst [1] : vector<8x8x128xf32> to vector<8x128xf32>
    %c0_1 = arith.constant 0 : index
    %c0_2 = arith.constant 0 : index
    %8 = vector.load %arg2[%c0_1, %c0_2] : memref<128x128xf32, #tpu.memory_space<vmem>>, vector<128x128xf32>
    %cst_3 = arith.constant dense<0.000000e+00> : vector<8x128xf32>
    %9 = tpu.matmul %7, %8, %cst_3 {dimension_numbers = #tpu.dot_dimension_numbers<[1], [0], [0], [1], [0, 0, 1, 1], [], []>} : vector<8x128xf32>, vector<128x128xf32>, vector<8x128xf32> -> vector<8x128xf32>
    %c0_4 = arith.constant 0 : index
    %c0_5 = arith.constant 0 : index
    %10 = vector.load %arg3[%c0_4, %c0_5] : memref<1x128xf32, #tpu.memory_space<vmem>>, vector<1x128xf32>
    %11 = vector.broadcast %10 : vector<1x128xf32> to vector<8x128xf32>
    %12 = arith.addf %9, %11 : vector<8x128xf32>
    %c0_6 = arith.constant 0 : index
    %c0_7 = arith.constant 0 : index
    %13 = vector.load %arg4[%c0_6, %c0_7] : memref<8x128xf32, #tpu.memory_space<vmem>>, vector<8x128xf32>
    tpu.vector_store %arg4[%c0_6, %c0_7], %12 {strides = array<i32>} : memref<8x128xf32, #tpu.memory_space<vmem>>, vector<8x128xf32>,
    return
  }
  func.func @transform_0(%arg0: i32) -> (i32, i32) {
    %c0_i32 = arith.constant 0 : i32
    %c0_i32_0 = arith.constant 0 : i32
    return %arg0, %c0_i32 : i32, i32
  }
  func.func @transform_1(%arg0: i32) -> (i32, i32) {
    %c0_i32 = arith.constant 0 : i32
    %c0_i32_0 = arith.constant 0 : i32
    %c0_i32_1 = arith.constant 0 : i32
    return %c0_i32, %c0_i32_0 : i32, i32
  }
  func.func @transform_2(%arg0: i32) -> (i32, i32) {
    %c0_i32 = arith.constant 0 : i32
    %c0_i32_0 = arith.constant 0 : i32
    %c0_i32_1 = arith.constant 0 : i32
    return %c0_i32, %c0_i32_0 : i32, i32
  }
  func.func @transform_3(%arg0: i32) -> (i32, i32) {
    %c0_i32 = arith.constant 0 : i32
    %c0_i32_0 = arith.constant 0 : i32
    return %arg0, %c0_i32 : i32, i32
  }
}

</mosaic_0001>

<llo_original>
// kernel: tpu_custom_call.1
$region0: #{tpu_custom_call.1}
  #allocation0 [shape = 'u32[]', space=smem, size = 0x4, offset = 0x4, fixed_abs, tag = 'smem constant byte address 0x4 - core index']
  #allocation1 [shape = 'u32[144,128]{1,0:T(1,128)}', space=vmem, size = 0x12000, scoped, tag = 'internal scratch']
  %s0 = inlined_call_operand.hbm [shape: s32[8,8], index: 0, kind: input, shape index: {}]
  %s1 = inlined_call_operand.hbm [shape: f32[128,128], index: 1, kind: input, shape index: {}]
  %s2 = inlined_call_operand.vmem [shape: f32[1,128], index: 2, kind: input, shape index: {}]
  %s3 = inlined_call_operand.hbm [shape: f32[8,128], index: 3, kind: output, shape index: {}]
  %s4 = sld [smem:[#allocation0]]
  $region30: #{tpu_custom_call.1} parent=0
    _
  %s6 = ssub.s32 1, %s4
  %s7 = scalar_select 0, %s6, %s4
  $region1: #{tpu_custom_call.1} parent=0
    #allocation2 [shape = 'u8[4096]{0}', space=vmem, size = 0x1000, scoped, tag = 'input window, operand 0, single buffered']
    #allocation3 [shape = 's32[1]{0}', space=sflag, size = 0x4, scoped, tag = 'scoped memory for tpu_custom_call.1']
    #allocation4 [shape = 's32[1]{0}', space=sflag, size = 0x4, scoped, tag = 'scoped memory for tpu_custom_call.1']
    #allocation5 [shape = 'u8[65536]{0}', space=vmem, size = 0x10000, scoped, tag = 'input window, operand 1, single buffered']
    #allocation6 [shape = 's32[1]{0}', space=sflag, size = 0x4, scoped, tag = 'scoped memory for tpu_custom_call.1']
    #allocation7 [shape = 'u8[4096]{0}', space=vmem, size = 0x1000, scoped, tag = 'output window, operand 0, single buffered']
    %8 = vsyncpa [#allocation3], 0
    %9 = vsyncpa [#allocation6], 0
    %10 = vsyncpa [#allocation4], 0
    // Predicated region
    $region2: #{tpu_custom_call.1} parent=1 // pred_check
      _
    $region3: #{tpu_custom_call.1} parent=1 // pred_check_branch
      %12 = sbr.rel (0) target = $region5
    $region4: #{tpu_custom_call.1} parent=1 // pred_region
      %s14 = ssub.s32 128, 128
      %15 = vsyncadd [#allocation3], %s14
      %s17 = sshll.u32 [#allocation2], 4
      %s18 = int_to_ptr.vmem [resolvable:$true] %s17
      %20 = dma.hbm_to_vmem [thread:$0]  %s0, 128, %s18, [#allocation3]
    $region5: #{tpu_custom_call.1} parent=1 // pred_fallthru
      _
    // Predicated region
    $region6: #{tpu_custom_call.1} parent=1 // pred_check
      _
    $region7: #{tpu_custom_call.1} parent=1 // pred_check_branch
      %22 = sbr.rel (0) target = $region9
    $region8: #{tpu_custom_call.1} parent=1 // pred_region
      %s24 = ssub.s32 2048, 2048
      %25 = vsyncadd [#allocation6], %s24
      %s26 = sshll.u32 [#allocation5], 4
      %s27 = int_to_ptr.vmem [resolvable:$true] %s26
      %32 = dma.hbm_to_vmem [thread:$0]  %s1, 2048, %s27, [#allocation6], 128, 128, 8
    $region9: #{tpu_custom_call.1} parent=1 // pred_fallthru
      _
    // Predicated region
    $region10: #{tpu_custom_call.1} parent=1 // pred_check
      _
    $region11: #{tpu_custom_call.1} parent=1 // pred_check_branch
      %34 = sbr.rel (0) target = $region13
    $region12: #{tpu_custom_call.1} parent=1 // pred_region
      _
    $region13: #{tpu_custom_call.1} parent=1 // pred_fallthru
      _
    // Predicated region
    $region14: #{tpu_custom_call.1} parent=1 // pred_check
      _
    $region15: #{tpu_custom_call.1} parent=1 // pred_check_branch
      %36 = sbr.rel (0) target = $region17
    $region16: #{tpu_custom_call.1} parent=1 // pred_region
      %37 = dma.done [#allocation3], 128
    $region17: #{tpu_custom_call.1} parent=1 // pred_fallthru
      _
    // Predicated region
    $region18: #{tpu_custom_call.1} parent=1 // pred_check
      _
    $region19: #{tpu_custom_call.1} parent=1 // pred_check_branch
      %39 = sbr.rel (0) target = $region21
    $region20: #{tpu_custom_call.1} parent=1 // pred_region
      %40 = dma.done [#allocation6], 2048
    $region21: #{tpu_custom_call.1} parent=1 // pred_fallthru
      _
    %v41 = vld [vmem:[#allocation2] sm:$0xff]
    %v42 = vlaneseq
    %v43 = vand.u32 %v42, 127
    %v44 = vlaneseq
    %v45 = vshrl.u32 %v44, 7
    %v46 = vsub.s32 0, %v45
    %v47 = vrot.slane %v41, %v46
    %49 = vbcast.lane.b32.xlu0 %v47, 256
    %v50 = vpop.permute.xlu0 %49
    %v51 = vlaneseq
    %v52 = vshrl.u32 %v51, 7
    %v53 = vsub.s32 1, %v52
    %v54 = vrot.slane %v41, %v53
    %56 = vbcast.lane.b32.xlu0 %v54, 256
    %v57 = vpop.permute.xlu0 %56
    %v58 = vlaneseq
    %v59 = vshrl.u32 %v58, 7
    %v60 = vsub.s32 2, %v59
    %v61 = vrot.slane %v41, %v60
    %63 = vbcast.lane.b32.xlu0 %v61, 256
    %v64 = vpop.permute.xlu0 %63
    %v65 = vlaneseq
    %v66 = vshrl.u32 %v65, 7
    %v67 = vsub.s32 3, %v66
    %v68 = vrot.slane %v41, %v67
    %70 = vbcast.lane.b32.xlu0 %v68, 256
    %v71 = vpop.permute.xlu0 %70
    %v72 = vlaneseq
    %v73 = vshrl.u32 %v72, 7
    %v74 = vsub.s32 4, %v73
    %v75 = vrot.slane %v41, %v74
    %77 = vbcast.lane.b32.xlu0 %v75, 256
    %v78 = vpop.permute.xlu0 %77
    %v79 = vlaneseq
    %v80 = vshrl.u32 %v79, 7
    %v81 = vsub.s32 5, %v80
    %v82 = vrot.slane %v41, %v81
    %84 = vbcast.lane.b32.xlu0 %v82, 256
    %v85 = vpop.permute.xlu0 %84
    %v86 = vlaneseq
    %v87 = vshrl.u32 %v86, 7
    %v88 = vsub.s32 6, %v87
    %v89 = vrot.slane %v41, %v88
    %91 = vbcast.lane.b32.xlu0 %v89, 256
    %v92 = vpop.permute.xlu0 %91
    %v93 = vlaneseq
    %v94 = vshrl.u32 %v93, 7
    %v95 = vsub.s32 7, %v94
    %v96 = vrot.slane %v41, %v95
    %98 = vbcast.lane.b32.xlu0 %v96, 256
    %v99 = vpop.permute.xlu0 %98
    %vm100 = vcmp.eq.s32.totalorder %v43, %v50
    %vm101 = vcmp.eq.s32.totalorder %v43, %v57
    %vm102 = vcmp.eq.s32.totalorder %v43, %v64
    %vm103 = vcmp.eq.s32.totalorder %v43, %v71
    %vm104 = vcmp.eq.s32.totalorder %v43, %v78
    %vm105 = vcmp.eq.s32.totalorder %v43, %v85
    %vm106 = vcmp.eq.s32.totalorder %v43, %v92
    %vm107 = vcmp.eq.s32.totalorder %v43, %v99
    %v108 = vsel %vm100, 1, 0
    %v109 = vsel %vm101, 1, 0
    %v110 = vsel %vm102, 1, 0
    %v111 = vsel %vm103, 1, 0
    %v112 = vsel %vm104, 1, 0
    %v113 = vsel %vm105, 1, 0
    %v114 = vsel %vm106, 1, 0
    %v115 = vsel %vm107, 1, 0
    %v116 = vcvt.s32.f32 %v108
    %v117 = vcvt.s32.f32 %v109
    %v118 = vcvt.s32.f32 %v110
    %v119 = vcvt.s32.f32 %v111
    %v120 = vcvt.s32.f32 %v112
    %v121 = vcvt.s32.f32 %v113
    %v122 = vcvt.s32.f32 %v114
    %v123 = vcvt.s32.f32 %v115
    %v124 = vrot.slane %v116, 4
    %v125 = vadd.f32 %v116, %v124
    %v126 = vrot.slane %v125, 2
    %v127 = vadd.f32 %v125, %v126
    %v128 = vrot.slane %v127, 1
    %v129 = vadd.f32 %v127, %v128
    %v130 = vrot.slane %v117, 4
    %v131 = vadd.f32 %v117, %v130
    %v132 = vrot.slane %v131, 2
    %v133 = vadd.f32 %v131, %v132
    %v134 = vrot.slane %v133, 1
    %v135 = vadd.f32 %v133, %v134
    %v136 = vrot.slane %v118, 4
    %v137 = vadd.f32 %v118, %v136
    %v138 = vrot.slane %v137, 2
    %v139 = vadd.f32 %v137, %v138
    %v140 = vrot.slane %v139, 1
    %v141 = vadd.f32 %v139, %v140
    %v142 = vrot.slane %v119, 4
    %v143 = vadd.f32 %v119, %v142
    %v144 = vrot.slane %v143, 2
    %v145 = vadd.f32 %v143, %v144
    %v146 = vrot.slane %v145, 1
    %v147 = vadd.f32 %v145, %v146
    %v148 = vrot.slane %v120, 4
    %v149 = vadd.f32 %v120, %v148
    %v150 = vrot.slane %v149, 2
    %v151 = vadd.f32 %v149, %v150
    %v152 = vrot.slane %v151, 1
    %v153 = vadd.f32 %v151, %v152
    %v154 = vrot.slane %v121, 4
    %v155 = vadd.f32 %v121, %v154
    %v156 = vrot.slane %v155, 2
    %v157 = vadd.f32 %v155, %v156
    %v158 = vrot.slane %v157, 1
    %v159 = vadd.f32 %v157, %v158
    %v160 = vrot.slane %v122, 4
    %v161 = vadd.f32 %v122, %v160
    %v162 = vrot.slane %v161, 2
    %v163 = vadd.f32 %v161, %v162
    %v164 = vrot.slane %v163, 1
    %v165 = vadd.f32 %v163, %v164
    %v166 = vrot.slane %v123, 4
    %v167 = vadd.f32 %v123, %v166
    %v168 = vrot.slane %v167, 2
    %v169 = vadd.f32 %v167, %v168
    %v170 = vrot.slane %v169, 1
    %v171 = vadd.f32 %v169, %v170
    %v172 = vld [vmem:[#allocation5] sm:$0xff]
    %v173 = vld [vmem:[#allocation5 + $0x8] sm:$0xff]
    %v174 = vld [vmem:[#allocation5 + $0x10] sm:$0xff]
    %v175 = vld [vmem:[#allocation5 + $0x18] sm:$0xff]
    %v176 = vld [vmem:[#allocation5 + $0x20] sm:$0xff]
    %v177 = vld [vmem:[#allocation5 + $0x28] sm:$0xff]
    %v178 = vld [vmem:[#allocation5 + $0x30] sm:$0xff]
    %v179 = vld [vmem:[#allocation5 + $0x38] sm:$0xff]
    %v180 = vld [vmem:[#allocation5 + $0x40] sm:$0xff]
    %v181 = vld [vmem:[#allocation5 + $0x48] sm:$0xff]
    %v182 = vld [vmem:[#allocation5 + $0x50] sm:$0xff]
    %v183 = vld [vmem:[#allocation5 + $0x58] sm:$0xff]
    %v184 = vld [vmem:[#allocation5 + $0x60] sm:$0xff]
    %v185 = vld [vmem:[#allocation5 + $0x68] sm:$0xff]
    %v186 = vld [vmem:[#allocation5 + $0x70] sm:$0xff]
    %v187 = vld [vmem:[#allocation5 + $0x78] sm:$0xff]
    %v188 = vld [vmem:[%s2] sm:$0x1]
    %v190 = vlaneseq
    %v191 = vshrl.u32 %v190, 7
    %v192 = vsub.s32 0, %v191
    %v193 = vrot.slane %v188, %v192
    %vm203 = vcmask 1041409
    %v204 = vsel %vm203, %v135, %v129
    %vm205 = vcmask 1042434
    %v206 = vsel %vm205, %v141, %v204
    %vm207 = vcmask 1043459
    %v208 = vsel %vm207, %v147, %v206
    %vm209 = vcmask 1044484
    %v210 = vsel %vm209, %v153, %v208
    %vm211 = vcmask 1045509
    %v212 = vsel %vm211, %v159, %v210
    %vm213 = vcmask 1046534
    %v214 = vsel %vm213, %v165, %v212
    %vm215 = vcmask 1047559
    %v216 = vsel %vm215, %v171, %v214
    %218 = vmatprep.subr.mxu0 0.0
    %219 = vmatpush1.msra.mxu0 %v172
    %220 = vmatprep.subr.mxu0 0.0
    %221 = vmatpush1.msra.mxu0 %v173
    %222 = vmatprep.subr.mxu0 0.0
    %223 = vmatpush1.msra.mxu0 %v174
    %224 = vmatprep.subr.mxu0 0.0
    %225 = vmatpush1.msra.mxu0 %v175
    %226 = vmatprep.subr.mxu0 0.0
    %227 = vmatpush1.msra.mxu0 %v176
    %228 = vmatprep.subr.mxu0 0.0
    %229 = vmatpush1.msra.mxu0 %v177
    %230 = vmatprep.subr.mxu0 0.0
    %231 = vmatpush1.msra.mxu0 %v178
    %232 = vmatprep.subr.mxu0 0.0
    %233 = vmatpush1.msra.mxu0 %v179
    %234 = vmatprep.subr.mxu0 0.0
    %235 = vmatpush1.msra.mxu0 %v180
    %236 = vmatprep.subr.mxu0 0.0
    %237 = vmatpush1.msra.mxu0 %v181
    %238 = vmatprep.subr.mxu0 0.0
    %239 = vmatpush1.msra.mxu0 %v182
    %240 = vmatprep.subr.mxu0 0.0
    %241 = vmatpush1.msra.mxu0 %v183
    %242 = vmatprep.subr.mxu0 0.0
    %243 = vmatpush1.msra.mxu0 %v184
    %244 = vmatprep.subr.mxu0 0.0
    %245 = vmatpush1.msra.mxu0 %v185
    %246 = vmatprep.subr.mxu0 0.0
    %247 = vmatpush1.msra.mxu0 %v186
    %248 = vmatprep.subr.mxu0 0.0
    %249 = vmatpush1.msra.mxu0 %v187
    %250 = vmatprep.subr.mxu0 0.0
    %251 = vmatpush1.msra.mxu0 0.0
    %252 = vmatprep.subr.mxu0 0.0
    %253 = vmatpush1.msra.mxu0 0.0
    %254 = vmatprep.subr.mxu0 0.0
    %255 = vmatpush1.msra.mxu0 0.0
    %256 = vmatprep.subr.mxu0 0.0
    %257 = vmatpush1.msra.mxu0 0.0
    %258 = vmatprep.subr.mxu0 0.0
    %259 = vmatpush1.msra.mxu0 0.0
    %260 = vmatprep.subr.mxu0 0.0
    %261 = vmatpush1.msra.mxu0 0.0
    %262 = vmatprep.subr.mxu0 0.0
    %263 = vmatpush1.msra.mxu0 0.0
    %264 = vmatprep.subr.mxu0 0.0
    %265 = vmatpush1.msra.mxu0 0.0
    %266 = vmatprep.subr.mxu0 0.0
    %267 = vmatpush1.msra.mxu0 0.0
    %268 = vmatprep.subr.mxu0 0.0
    %269 = vmatpush1.msra.mxu0 0.0
    %270 = vmatprep.subr.mxu0 0.0
    %271 = vmatpush1.msra.mxu0 0.0
    %272 = vmatprep.subr.mxu0 0.0
    %273 = vmatpush1.msra.mxu0 0.0
    %274 = vmatprep.subr.mxu0 0.0
    %275 = vmatpush1.msra.mxu0 0.0
    %276 = vmatprep.subr.mxu0 0.0
    %277 = vmatpush1.msra.mxu0 0.0
    %278 = vmatprep.subr.mxu0 0.0
    %279 = vmatpush1.msra.mxu0 0.0
    %280 = vmatprep.subr.mxu0 0.0
    %281 = vmatpush1.msra.mxu0 0.0
    %282 = vmatprep.mubr.f32.mxu0 0.0
    %283 = vmatmul.mubr.f32.gmra.mrb[0].mxu0 %v216
    %v284 = vpop.f32.mrb[0].mxu0
    %v285 = vadd.f32 %v193, %v284
    %v286 = vpop.f32.mrb[0].mxu0
    %287 = vdwg.mxu0
    %288 = vst [vmem:[#allocation7] sm:$0xff] %v285
    // Predicated region
    $region22: #{tpu_custom_call.1} parent=1 // pred_check
      _
    $region23: #{tpu_custom_call.1} parent=1 // pred_check_branch
      %290 = sbr.rel (0) target = $region25
    $region24: #{tpu_custom_call.1} parent=1 // pred_region
      %s292 = ssub.s32 128, 128
      %293 = vsyncadd [#allocation4], %s292
      %s295 = sshll.u32 [#allocation7], 4
      %s296 = int_to_ptr.vmem [resolvable:$true] %s295
      %298 = dma.vmem_to_hbm [thread:$0]  %s296, 128, %s3, [#allocation4]
    $region25: #{tpu_custom_call.1} parent=1 // pred_fallthru
      _
    // Predicated region
    $region26: #{tpu_custom_call.1} parent=1 // pred_check
      _
    $region27: #{tpu_custom_call.1} parent=1 // pred_check_branch
      %300 = sbr.rel (0) target = $region29
    $region28: #{tpu_custom_call.1} parent=1 // pred_region
      %301 = dma.done [#allocation4], 128
    $region29: #{tpu_custom_call.1} parent=1 // pred_fallthru
      _
    %302 = vsyncpa [#allocation3], 1
    %303 = vsyncpa [#allocation6], 1
    %304 = vsyncpa [#allocation4], 1

</llo_original>
